<compile_context>
chip_gen: v5e
topology: v5e:2x2
jax: 0.10.0
libtpu: 0.0.40
codegen_flags: <defaults>
</compile_context>

<pallas_src>
import functools

import jax
import jax.numpy as jnp
from jax.experimental import pallas as pl
from jax.experimental.pallas import tpu as pltpu


def _round_up(x, m):
    return ((x + m - 1) // m) * m


def _mlp_kernel(x_ref, wg_ref, wu_ref, wd_ref, o_ref, acc_ref):
    """One (M-tile, I-tile) step of the gated MLP.

    x_ref  : (tm, H)       activation tile (same block for every j)
    wg_ref : (H, ti)       gate_proj weight slice for I-tile j
    wu_ref : (H, ti)       up_proj   weight slice for I-tile j
    wd_ref : (ti, H)       down_proj weight slice for I-tile j
    o_ref  : (tm, H)       output tile (written once, at j == last)
    acc_ref: (tm, H) f32   VMEM accumulator for the down_proj reduction over I
    """
    j = pl.program_id(1)

    @pl.when(j == 0)
    def _init():
        acc_ref[...] = jnp.zeros_like(acc_ref)

    x = x_ref[...]
    # gate / up projections share the same LHS x tile; both go to the MXU.
    gate = jnp.dot(x, wg_ref[...], preferred_element_type=jnp.float32)
    up = jnp.dot(x, wu_ref[...], preferred_element_type=jnp.float32)
    # SiLU(gate) * up in f32 (sigmoid -> EUP, muls -> VPU).
    h = (gate * jax.nn.sigmoid(gate)) * up
    # Partial down_proj for this I-tile, accumulated in f32.
    acc_ref[...] += jnp.dot(
        h.astype(wd_ref.dtype), wd_ref[...], preferred_element_type=jnp.float32
    )

    @pl.when(j == pl.num_programs(1) - 1)
    def _finalize():
        o_ref[...] = acc_ref[...].astype(o_ref.dtype)


@functools.partial(jax.jit, static_argnames=("tile_m", "tile_i"))
def deepseek_v2_mlp(x, w_gate, w_up, w_down, *, tile_m=256, tile_i=256):
    """x: [..., H]; w_gate/w_up: [H, I]; w_down: [I, H]. Returns [..., H].

    Weights are stored pre-transposed vs. nn.Linear's [out, in] layout so the
    kernel runs plain row-major x @ W matmuls on the MXU (in production this
    transpose happens once at weight-load time).
    """
    orig_shape = x.shape
    H = orig_shape[-1]
    I = w_gate.shape[1]
    x2d = x.reshape(-1, H)
    M = x2d.shape[0]

    # ---- M tiling: no divisibility requirement; zero-pad rows. ----
    if M <= tile_m:
        tm = M                       # single M tile; block == full dim is legal
        m_pad = M
    else:
        tm = _round_up(min(tile_m, M), 8)
        m_pad = _round_up(M, tm)
    if m_pad != M:
        x2d = jnp.pad(x2d, ((0, m_pad - M), (0, 0)))
    grid_m = m_pad // tm

    # ---- I tiling (reduction axis): zero-pad cols/rows if needed. ----
    if I <= tile_i:
        ti = I
        i_pad = I
    else:
        ti = _round_up(min(tile_i, I), 128)   # keep weight blocks lane-aligned
        i_pad = _round_up(I, ti)
    grid_i = i_pad // ti

    wg, wu, wd = w_gate, w_up, w_down
    if i_pad != I:
        wg = jnp.pad(wg, ((0, 0), (0, i_pad - I)))
        wu = jnp.pad(wu, ((0, 0), (0, i_pad - I)))
        wd = jnp.pad(wd, ((0, i_pad - I), (0, 0)))

    itemsize = jnp.dtype(x.dtype).itemsize
    cost = pl.CostEstimate(
        flops=6 * M * H * I,                  # 2*M*H*I each for gate, up, down
        transcendentals=M * I,                # sigmoid inside SiLU
        bytes_accessed=(2 * m_pad * H + grid_m * 3 * H * i_pad) * itemsize,
    )

    out = pl.pallas_call(
        _mlp_kernel,
        out_shape=jax.ShapeDtypeStruct((m_pad, H), x.dtype),
        grid_spec=pltpu.PrefetchScalarGridSpec(
            num_scalar_prefetch=0,
            grid=(grid_m, grid_i),
            in_specs=[
                pl.BlockSpec((tm, H), lambda i, j: (i, 0)),   # x tile (resident over j)
                pl.BlockSpec((H, ti), lambda i, j: (0, j)),   # gate_proj slice
                pl.BlockSpec((H, ti), lambda i, j: (0, j)),   # up_proj slice
                pl.BlockSpec((ti, H), lambda i, j: (j, 0)),   # down_proj slice
            ],
            out_specs=pl.BlockSpec((tm, H), lambda i, j: (i, 0)),
            scratch_shapes=[pltpu.VMEM((tm, H), jnp.float32)],  # f32 accumulator
        ),
        compiler_params=pltpu.CompilerParams(
            dimension_semantics=("parallel", "arbitrary"),
            vmem_limit_bytes=48 * 1024 * 1024,  # > 32 MiB default, < v7x 64 MiB physical
        ),
        cost_estimate=cost,
    )(x2d, wg, wu, wd)

    if m_pad != M:
        out = out[:M]
    return out.reshape(orig_shape)


def _reference_mlp(x, w_gate, w_up, w_down):
    gate = jnp.einsum("...h,hi->...i", x, w_gate)
    up = jnp.einsum("...h,hi->...i", x, w_up)
    h = jax.nn.silu(gate) * up
    return jnp.einsum("...i,ih->...h", h, w_down)


if __name__ == "__main__":
    # Small shapes consistent with the module: batch=2, seq=8, hidden=32, intermediate=64.
    batch, seq, hidden, intermediate = 2, 8, 32, 64

    key = jax.random.PRNGKey(0)
    kx, kg, ku, kd = jax.random.split(key, 4)

    x = jax.random.normal(kx, (batch, seq, hidden), dtype=jnp.float32)
    # nn.Linear(in, out, bias=False).weight is [out, in]; we store the transpose
    # [in, out] so the kernel does direct x @ W matmuls.
    w_gate = jax.random.normal(kg, (hidden, intermediate), dtype=jnp.float32) * 0.05
    w_up = jax.random.normal(ku, (hidden, intermediate), dtype=jnp.float32) * 0.05
    w_down = jax.random.normal(kd, (intermediate, hidden), dtype=jnp.float32) * 0.05

    # 1) f32 path (single M tile, single I tile) vs reference.
    out = jax.block_until_ready(deepseek_v2_mlp(x, w_gate, w_up, w_down))
    ref = _reference_mlp(x, w_gate, w_up, w_down)
    assert out.shape == (batch, seq, hidden)
    assert jnp.allclose(out, ref, atol=1e-5, rtol=1e-5), "f32 mismatch vs reference"

    # 2) bf16 path (production dtype for MXU throughput / halved HBM traffic).
    xb, wgb, wub, wdb = (a.astype(jnp.bfloat16) for a in (x, w_gate, w_up, w_down))
    out_bf16 = jax.block_until_ready(deepseek_v2_mlp(xb, wgb, wub, wdb))
    ref_bf16 = _reference_mlp(
        xb.astype(jnp.float32), wgb.astype(jnp.float32),
        wub.astype(jnp.float32), wdb.astype(jnp.float32),
    )
    assert jnp.allclose(out_bf16.astype(jnp.float32), ref_bf16, atol=2e-2, rtol=2e-2), \
        "bf16 mismatch vs reference"

    # 3) Multi-tile path: non-divisible M (padding) + I reduction over several tiles
    #    (exercises the accumulator init/writeback logic).
    hidden2, inter2 = 32, 256
    kg2, ku2, kd2, kx2 = jax.random.split(jax.random.PRNGKey(1), 4)
    w_gate2 = jax.random.normal(kg2, (hidden2, inter2), dtype=jnp.float32) * 0.05
    w_up2 = jax.random.normal(ku2, (hidden2, inter2), dtype=jnp.float32) * 0.05
    w_down2 = jax.random.normal(kd2, (inter2, hidden2), dtype=jnp.float32) * 0.05
    x_big = jax.random.normal(kx2, (3, 101, hidden2), dtype=jnp.float32)  # M = 303

    out_big = jax.block_until_ready(
        deepseek_v2_mlp(x_big, w_gate2, w_up2, w_down2, tile_m=128, tile_i=128)
    )
    ref_big = _reference_mlp(x_big, w_gate2, w_up2, w_down2)
    assert out_big.shape == x_big.shape
    assert jnp.allclose(out_big, ref_big, atol=1e-4, rtol=1e-4), "tiled mismatch vs reference"

    print("KERNEL_OK")
</pallas_src>

<mosaic_0001>
module attributes {stable_mosaic.version = 11 : i64} {
  func.func @_mlp_kernel(%arg0: i32, %arg1: i32, %arg2: memref<16x32xf32, #tpu.memory_space<vmem>>, %arg3: memref<32x64xf32, #tpu.memory_space<vmem>>, %arg4: memref<32x64xf32, #tpu.memory_space<vmem>>, %arg5: memref<64x32xf32, #tpu.memory_space<vmem>>, %arg6: memref<16x32xf32, #tpu.memory_space<vmem>>, %arg7: memref<16x32xf32, #tpu.memory_space<vmem>>) attributes {dimension_semantics = [#tpu.dimension_semantics<parallel>, #tpu.dimension_semantics<arbitrary>], iteration_bounds = array<i64: 1, 1>, scalar_prefetch = 0 : i64, scratch_operands = 1 : i64, tpu.core_type = #tpu.core_type<tc>, window_params = [{transform_indices = @transform_0, window_bounds = array<i64: 16, 32>}, {transform_indices = @transform_1, window_bounds = array<i64: 32, 64>}, {transform_indices = @transform_2, window_bounds = array<i64: 32, 64>}, {transform_indices = @transform_3, window_bounds = array<i64: 64, 32>}, {transform_indices = @transform_4, window_bounds = array<i64: 16, 32>}]} {
    %c0_i32 = arith.constant 0 : i32
    %0 = arith.cmpi eq, %arg1, %c0_i32 : i32
    %1 = arith.extui %0 : i1 to i32
    %c0_i32_0 = arith.constant 0 : i32
    %2 = arith.cmpi ne, %1, %c0_i32_0 : i32
    scf.if %2 {
      %cst_17 = arith.constant 0.000000e+00 : f32
      %23 = vector.broadcast %cst_17 : f32 to vector<16x32xf32>
      %c0_18 = arith.constant 0 : index
      %c0_19 = arith.constant 0 : index
      %24 = vector.load %arg7[%c0_18, %c0_19] : memref<16x32xf32, #tpu.memory_space<vmem>>, vector<16x32xf32>
      tpu.vector_store %arg7[%c0_18, %c0_19], %23 {strides = array<i32>} : memref<16x32xf32, #tpu.memory_space<vmem>>, vector<16x32xf32>,
    } else {
    }
    %c0 = arith.constant 0 : index
    %c0_1 = arith.constant 0 : index
    %3 = vector.load %arg2[%c0, %c0_1] : memref<16x32xf32, #tpu.memory_space<vmem>>, vector<16x32xf32>
    %c0_2 = arith.constant 0 : index
    %c0_3 = arith.constant 0 : index
    %4 = vector.load %arg3[%c0_2, %c0_3] : memref<32x64xf32, #tpu.memory_space<vmem>>, vector<32x64xf32>
    %cst = arith.constant dense<0.000000e+00> : vector<16x64xf32>
    %5 = tpu.matmul %3, %4, %cst {dimension_numbers = #tpu.dot_dimension_numbers<[1], [0], [0], [1], [0, 0, 1, 1], [], []>} : vector<16x32xf32>, vector<32x64xf32>, vector<16x64xf32> -> vector<16x64xf32>
    %c0_4 = arith.constant 0 : index
    %c0_5 = arith.constant 0 : index
    %6 = vector.load %arg4[%c0_4, %c0_5] : memref<32x64xf32, #tpu.memory_space<vmem>>, vector<32x64xf32>
    %cst_6 = arith.constant dense<0.000000e+00> : vector<16x64xf32>
    %7 = tpu.matmul %3, %6, %cst_6 {dimension_numbers = #tpu.dot_dimension_numbers<[1], [0], [0], [1], [0, 0, 1, 1], [], []>} : vector<16x32xf32>, vector<32x64xf32>, vector<16x64xf32> -> vector<16x64xf32>
    %8 = arith.negf %5 : vector<16x64xf32>
    %9 = math.exp %8 : vector<16x64xf32>
    %cst_7 = arith.constant 1.000000e+00 : f32
    %10 = vector.broadcast %cst_7 : f32 to vector<16x64xf32>
    %11 = arith.addf %10, %9 : vector<16x64xf32>
    %12 = arith.divf %10, %11 : vector<16x64xf32>
    %13 = arith.mulf %5, %12 : vector<16x64xf32>
    %14 = arith.mulf %13, %7 : vector<16x64xf32>
    %c0_8 = arith.constant 0 : index
    %c0_9 = arith.constant 0 : index
    %15 = vector.load %arg7[%c0_8, %c0_9] : memref<16x32xf32, #tpu.memory_space<vmem>>, vector<16x32xf32>
    %c0_10 = arith.constant 0 : index
    %c0_11 = arith.constant 0 : index
    %16 = vector.load %arg5[%c0_10, %c0_11] : memref<64x32xf32, #tpu.memory_space<vmem>>, vector<64x32xf32>
    %cst_12 = arith.constant dense<0.000000e+00> : vector<16x32xf32>
    %17 = tpu.matmul %14, %16, %cst_12 {dimension_numbers = #tpu.dot_dimension_numbers<[1], [0], [0], [1], [0, 0, 1, 1], [], []>} : vector<16x64xf32>, vector<64x32xf32>, vector<16x32xf32> -> vector<16x32xf32>
    %18 = arith.addf %15, %17 : vector<16x32xf32>
    %c0_13 = arith.constant 0 : index
    %c0_14 = arith.constant 0 : index
    %19 = vector.load %arg7[%c0_13, %c0_14] : memref<16x32xf32, #tpu.memory_space<vmem>>, vector<16x32xf32>
    tpu.vector_store %arg7[%c0_13, %c0_14], %18 {strides = array<i32>} : memref<16x32xf32, #tpu.memory_space<vmem>>, vector<16x32xf32>,
    %c0_i32_15 = arith.constant 0 : i32
    %20 = arith.cmpi eq, %arg1, %c0_i32_15 : i32
    %21 = arith.extui %20 : i1 to i32
    %c0_i32_16 = arith.constant 0 : i32
    %22 = arith.cmpi ne, %21, %c0_i32_16 : i32
    scf.if %22 {
      %c0_17 = arith.constant 0 : index
      %c0_18 = arith.constant 0 : index
      %23 = vector.load %arg7[%c0_17, %c0_18] : memref<16x32xf32, #tpu.memory_space<vmem>>, vector<16x32xf32>
      %c0_19 = arith.constant 0 : index
      %c0_20 = arith.constant 0 : index
      %24 = vector.load %arg6[%c0_19, %c0_20] : memref<16x32xf32, #tpu.memory_space<vmem>>, vector<16x32xf32>
      tpu.vector_store %arg6[%c0_19, %c0_20], %23 {strides = array<i32>} : memref<16x32xf32, #tpu.memory_space<vmem>>, vector<16x32xf32>,
    } else {
    }
    return
  }
  func.func @transform_0(%arg0: i32, %arg1: i32) -> (i32, i32) {
    %c0_i32 = arith.constant 0 : i32
    %c0_i32_0 = arith.constant 0 : i32
    return %arg0, %c0_i32 : i32, i32
  }
  func.func @transform_1(%arg0: i32, %arg1: i32) -> (i32, i32) {
    %c0_i32 = arith.constant 0 : i32
    %c0_i32_0 = arith.constant 0 : i32
    return %c0_i32, %arg1 : i32, i32
  }
  func.func @transform_2(%arg0: i32, %arg1: i32) -> (i32, i32) {
    %c0_i32 = arith.constant 0 : i32
    %c0_i32_0 = arith.constant 0 : i32
    return %c0_i32, %arg1 : i32, i32
  }
  func.func @transform_3(%arg0: i32, %arg1: i32) -> (i32, i32) {
    %c0_i32 = arith.constant 0 : i32
    %c0_i32_0 = arith.constant 0 : i32
    return %arg1, %c0_i32 : i32, i32
  }
  func.func @transform_4(%arg0: i32, %arg1: i32) -> (i32, i32) {
    %c0_i32 = arith.constant 0 : i32
    %c0_i32_0 = arith.constant 0 : i32
    return %arg0, %c0_i32 : i32, i32
  }
}

</mosaic_0001>

<llo_original>
// kernel: deepseek_v2_mlp.1
$region0: #{deepseek_v2_mlp.1}
  #allocation0 [shape = 'u32[]', space=smem, size = 0x4, offset = 0x4, fixed_abs, tag = 'smem constant byte address 0x4 - core index']
  #allocation1 [shape = 'u32[72,128]{1,0:T(1,128)}', space=vmem, size = 0x9000, scoped, tag = 'internal scratch']
  #allocation2 [shape = 'f32[16,32]{1,0:T(8,128)}', space=vmem, size = 0x2000, scoped, tag = 'scratch operand']
  %s0 = inlined_call_operand.vmem [shape: f32[16,32], index: 0, kind: input, shape index: {}]
  %s1 = inlined_call_operand.vmem [shape: f32[32,64], index: 1, kind: input, shape index: {}]
  %s2 = inlined_call_operand.vmem [shape: f32[32,64], index: 2, kind: input, shape index: {}]
  %s3 = inlined_call_operand.vmem [shape: f32[64,32], index: 3, kind: input, shape index: {}]
  %s4 = inlined_call_operand.hbm [shape: f32[16,32], index: 4, kind: output, shape index: {}]
  %s5 = sld [smem:[#allocation0]]
  $region34: #{deepseek_v2_mlp.1} parent=0
    _
  %s7 = ssub.s32 1, %s5
  %s8 = scalar_select 0, %s7, %s5
  $region1: #{deepseek_v2_mlp.1} parent=0
    #allocation3 [shape = 'u8[8192]{0}', space=vmem, size = 0x2000, scoped, tag = 'output window, operand 0, single buffered']
    #allocation4 [shape = 's32[1]{0}', space=sflag, size = 0x4, scoped, tag = 'scoped memory for deepseek_v2_mlp.1']
    %9 = vsyncpa [#allocation4], 0
    // Predicated region
    $region2: #{deepseek_v2_mlp.1} parent=1 // pred_check
      _
    $region3: #{deepseek_v2_mlp.1} parent=1 // pred_check_branch
      %11 = sbr.rel (0) target = $region5
    $region4: #{deepseek_v2_mlp.1} parent=1 // pred_region
      _
    $region5: #{deepseek_v2_mlp.1} parent=1 // pred_fallthru
      _
    // Predicated region
    $region6: #{deepseek_v2_mlp.1} parent=1 // pred_check
      _
    $region7: #{deepseek_v2_mlp.1} parent=1 // pred_check_branch
      %13 = sbr.rel (0) target = $region9
    $region8: #{deepseek_v2_mlp.1} parent=1 // pred_region
      _
    $region9: #{deepseek_v2_mlp.1} parent=1 // pred_fallthru
      _
    // Predicated region
    $region10: #{deepseek_v2_mlp.1} parent=1 // pred_check
      _
    $region11: #{deepseek_v2_mlp.1} parent=1 // pred_check_branch
      %15 = sbr.rel (0) target = $region13
    $region12: #{deepseek_v2_mlp.1} parent=1 // pred_region
      _
    $region13: #{deepseek_v2_mlp.1} parent=1 // pred_fallthru
      _
    // Predicated region
    $region14: #{deepseek_v2_mlp.1} parent=1 // pred_check
      _
    $region15: #{deepseek_v2_mlp.1} parent=1 // pred_check_branch
      %17 = sbr.rel (0) target = $region17
    $region16: #{deepseek_v2_mlp.1} parent=1 // pred_region
      _
    $region17: #{deepseek_v2_mlp.1} parent=1 // pred_fallthru
      _
    %p18 = scmp.eq.s32.totalorder 0, 0
    // Predicated region
    $region18: #{deepseek_v2_mlp.1} parent=1 // pred_check
      %p19 = pneg %p18
    $region19: #{deepseek_v2_mlp.1} parent=1 // pred_check_branch
      %21 = sbr.rel (%p19) target = $region21
    $region20: #{deepseek_v2_mlp.1} parent=1 // pred_region
      %vm22 = vcmask 261120
      %23 = vst.msk [vmem:[#allocation2] sm:$0xff] %vm22, 0.0
      %24 = vst.msk [vmem:[#allocation2 + $0x8] sm:$0xff] %vm22, 0.0
    $region21: #{deepseek_v2_mlp.1} parent=1 // pred_fallthru
      _
    %v25 = vld [vmem:[%s0] sm:$0xff]
    %v26 = vld [vmem:[%s0 + $0x8] sm:$0xff]
    %v27 = vld [vmem:[%s1] sm:$0xff]
    %v28 = vld [vmem:[%s1 + $0x8] sm:$0xff]
    %v29 = vld [vmem:[%s1 + $0x10] sm:$0xff]
    %v30 = vld [vmem:[%s1 + $0x18] sm:$0xff]
    %vm31 = vcmask 261120
    %v33 = vsel %vm31, %v25, 0
    %v36 = vsel %vm31, %v26, 0
    %38 = vmatpush.msra.mxu0 0.0
    %39 = vmatpush.msra.mxu0 0.0
    %40 = vmatpush.msra.mxu0 0.0
    %41 = vmatpush.msra.mxu0 0.0
    %42 = vmatpush.msra.mxu0 0.0
    %43 = vmatpush.msra.mxu0 0.0
    %44 = vmatpush.msra.mxu0 0.0
    %45 = vmatpush.msra.mxu0 0.0
    %46 = vmatpush.msra.mxu0 0.0
    %47 = vmatpush.msra.mxu0 0.0
    %48 = vmatpush.msra.mxu0 0.0
    %49 = vmatpush.msra.mxu0 0.0
    %50 = vmatpush.msra.mxu0 %v30
    %51 = vmatpush.msra.mxu0 %v29
    %52 = vmatpush.msra.mxu0 %v28
    %53 = vmatpush.msra.mxu0 %v27
    %54 = vmatmul.f32.gmra.mxu0 %v33
    %v55 = vpop.f32.mrf.mxu0
    %v56 = vadd.f32 0.0, %v55
    %57 = vmatmul.f32.gmra.mxu0 %v36
    %v58 = vpop.f32.mrf.mxu0
    %v59 = vadd.f32 0.0, %v58
    %60 = vdwg.mxu0
    %v61 = vld [vmem:[%s2] sm:$0xff]
    %v62 = vld [vmem:[%s2 + $0x8] sm:$0xff]
    %v63 = vld [vmem:[%s2 + $0x10] sm:$0xff]
    %v64 = vld [vmem:[%s2 + $0x18] sm:$0xff]
    %65 = vmatpush.msra.mxu0 0.0
    %66 = vmatpush.msra.mxu0 0.0
    %67 = vmatpush.msra.mxu0 0.0
    %68 = vmatpush.msra.mxu0 0.0
    %69 = vmatpush.msra.mxu0 0.0
    %70 = vmatpush.msra.mxu0 0.0
    %71 = vmatpush.msra.mxu0 0.0
    %72 = vmatpush.msra.mxu0 0.0
    %73 = vmatpush.msra.mxu0 0.0
    %74 = vmatpush.msra.mxu0 0.0
    %75 = vmatpush.msra.mxu0 0.0
    %76 = vmatpush.msra.mxu0 0.0
    %77 = vmatpush.msra.mxu0 %v64
    %78 = vmatpush.msra.mxu0 %v63
    %79 = vmatpush.msra.mxu0 %v62
    %80 = vmatpush.msra.mxu0 %v61
    %81 = vmatmul.f32.gmra.mxu0 %v33
    %v82 = vpop.f32.mrf.mxu0
    %v83 = vadd.f32 0.0, %v82
    %84 = vmatmul.f32.gmra.mxu0 %v36
    %v85 = vpop.f32.mrf.mxu0
    %v86 = vadd.f32 0.0, %v85
    %87 = vdwg.mxu0
    %v88 = vxor.u32 %v56, 2147483648
    %v89 = vxor.u32 %v59, 2147483648
    %v90 = vmul.f32 %v88, 1.442695
    %v91 = vpow.pop %v90
    %v92 = vmul.f32 %v89, 1.442695
    %v93 = vpow.pop %v92
    %v94 = vadd.f32 %v91, 1.0
    %v95 = vadd.f32 %v93, 1.0
    %v96 = vrcp.pop %v94
    %v97 = vmul.f32 %v94, %v96
    %v98 = vsub.f32 1.0, %v97
    %v99 = vmul.f32 %v96, %v98
    %v100 = vadd.f32 %v96, %v99
    %vm101 = vweird.f32 %v94
    %vm102 = vweird.f32 %v96
    %vm103 = vmor %vm101, %vm102
    %v104 = vsel %vm103, %v96, %v100
    %v105 = vand.u32 2147483647, %v94
    %vm106 = vcmp.eq.f32.partialorder %v105, 8.507059e+37
    %v107 = vand.u32 %v94, 2147483648
    %v108 = vor.u32 1.1754944e-38, %v107
    %v109 = vsel %vm106, %v108, %v104
    %v110 = vmul.f32 1.0, %v109
    %v111 = vrcp.pop %v95
    %v112 = vmul.f32 %v95, %v111
    %v113 = vsub.f32 1.0, %v112
    %v114 = vmul.f32 %v111, %v113
    %v115 = vadd.f32 %v111, %v114
    %vm116 = vweird.f32 %v95
    %vm117 = vweird.f32 %v111
    %vm118 = vmor %vm116, %vm117
    %v119 = vsel %vm118, %v111, %v115
    %v120 = vand.u32 2147483647, %v95
    %vm121 = vcmp.eq.f32.partialorder %v120, 8.507059e+37
    %v122 = vand.u32 %v95, 2147483648
    %v123 = vor.u32 1.1754944e-38, %v122
    %v124 = vsel %vm121, %v123, %v119
    %v125 = vmul.f32 1.0, %v124
    %v126 = vmul.f32 %v56, %v110
    %v127 = vmul.f32 %v59, %v125
    %v128 = vmul.f32 %v126, %v83
    %v129 = vmul.f32 %v127, %v86
    %v130 = vld [vmem:[#allocation2] sm:$0xff]
    %v131 = vld [vmem:[#allocation2 + $0x8] sm:$0xff]
    %v132 = vld [vmem:[%s3] sm:$0xff]
    %v133 = vld [vmem:[%s3 + $0x8] sm:$0xff]
    %v134 = vld [vmem:[%s3 + $0x10] sm:$0xff]
    %v135 = vld [vmem:[%s3 + $0x18] sm:$0xff]
    %v136 = vld [vmem:[%s3 + $0x20] sm:$0xff]
    %v137 = vld [vmem:[%s3 + $0x28] sm:$0xff]
    %v138 = vld [vmem:[%s3 + $0x30] sm:$0xff]
    %v139 = vld [vmem:[%s3 + $0x38] sm:$0xff]
    %vm140 = vcmask 523264
    %v142 = vsel %vm140, %v128, 0
    %v145 = vsel %vm140, %v129, 0
    %147 = vmatpush.msra.mxu0 0.0
    %148 = vmatpush.msra.mxu0 0.0
    %149 = vmatpush.msra.mxu0 0.0
    %150 = vmatpush.msra.mxu0 0.0
    %151 = vmatpush.msra.mxu0 0.0
    %152 = vmatpush.msra.mxu0 0.0
    %153 = vmatpush.msra.mxu0 0.0
    %154 = vmatpush.msra.mxu0 0.0
    %155 = vmatpush.msra.mxu0 %v139
    %156 = vmatpush.msra.mxu0 %v138
    %157 = vmatpush.msra.mxu0 %v137
    %158 = vmatpush.msra.mxu0 %v136
    %159 = vmatpush.msra.mxu0 %v135
    %160 = vmatpush.msra.mxu0 %v134
    %161 = vmatpush.msra.mxu0 %v133
    %162 = vmatpush.msra.mxu0 %v132
    %163 = vmatmul.f32.gmra.mxu0 %v142
    %v164 = vpop.f32.mrf.mxu0
    %v165 = vadd.f32 0.0, %v164
    %166 = vmatmul.f32.gmra.mxu0 %v145
    %v167 = vpop.f32.mrf.mxu0
    %v168 = vadd.f32 0.0, %v167
    %169 = vdwg.mxu0
    %v170 = vadd.f32 %v130, %v165
    %v171 = vadd.f32 %v131, %v168
    %172 = vst.msk [vmem:[#allocation2] sm:$0xff] %vm31, %v170
    %173 = vst.msk [vmem:[#allocation2 + $0x8] sm:$0xff] %vm31, %v171
    // Predicated region
    $region22: #{deepseek_v2_mlp.1} parent=1 // pred_check
      %p174 = pneg %p18
    $region23: #{deepseek_v2_mlp.1} parent=1 // pred_check_branch
      %176 = sbr.rel (%p174) target = $region25
    $region24: #{deepseek_v2_mlp.1} parent=1 // pred_region
      %v177 = vld [vmem:[#allocation2] sm:$0xff]
      %v178 = vld [vmem:[#allocation2 + $0x8] sm:$0xff]
      %179 = vst.msk [vmem:[#allocation3] sm:$0xff] %vm31, %v177
      %180 = vst.msk [vmem:[#allocation3 + $0x8] sm:$0xff] %vm31, %v178
    $region25: #{deepseek_v2_mlp.1} parent=1 // pred_fallthru
      _
    // Predicated region
    $region26: #{deepseek_v2_mlp.1} parent=1 // pred_check
      _
    $region27: #{deepseek_v2_mlp.1} parent=1 // pred_check_branch
      %182 = sbr.rel (0) target = $region29
    $region28: #{deepseek_v2_mlp.1} parent=1 // pred_region
      %184 = vsyncadd [#allocation4], 0
      %s185 = sshll.u32 [#allocation3], 4
      %s186 = int_to_ptr.vmem [resolvable:$true] %s185
      %s187 = sshll.u32 %s4, 4
      %s188 = int_to_ptr.hbm [resolvable:$true] %s187
      %193 = dma.vmem_to_hbm [thread:$0]  %s186, 256, %s188, [#allocation4], 128, 128, 8
    $region29: #{deepseek_v2_mlp.1} parent=1 // pred_fallthru
      _
    // Predicated region
    $region30: #{deepseek_v2_mlp.1} parent=1 // pred_check
      _
    $region31: #{deepseek_v2_mlp.1} parent=1 // pred_check_branch
      %195 = sbr.rel (0) target = $region33
    $region32: #{deepseek_v2_mlp.1} parent=1 // pred_region
      %197 = dma.done [#allocation4], 256
    $region33: #{deepseek_v2_mlp.1} parent=1 // pred_fallthru
      _
    %198 = vsyncpa [#allocation4], 1

</llo_original>
